<compile_context>
chip_gen: v7x
topology: tpu7x:2x2x1
jax: 0.10.0
libtpu: 0.0.40
codegen_flags: <defaults>
</compile_context>

<pallas_src>
import jax
import jax.numpy as jnp
from jax.experimental import pallas as pl
from jax.experimental.pallas import tpu as pltpu


_MAX_LANE_TILE = 32768        # hard cap on spatial lanes per block
_MAX_BATCH_TILE = 32          # cap on images per grid step (trace size)
_TARGET_STEP_BYTES = 4 << 20  # aim for ~4 MiB of x+out per grid step


# ----------------------------------------------------------------------------
# Kernels
# ----------------------------------------------------------------------------
def _conv1x1_kernel_mxu(x_ref, w_ref, b_ref, o_ref):
    # x_ref: (Bb, Cin, TN)  w_ref: (Tco, Cin)  b_ref: (Tco, 1)  o_ref: (Bb, Tco, TN)
    w = w_ref[...]
    bias = b_ref[...].astype(jnp.float32)
    for i in range(x_ref.shape[0]):                 # small static unroll over batch block
        acc = jnp.dot(w, x_ref[i], preferred_element_type=jnp.float32)
        o_ref[i] = (acc + bias).astype(o_ref.dtype)


def _conv1x1_kernel_vpu(x_ref, w_ref, b_ref, o_ref):
    # Small-Cin specialization: Cin broadcast multiply-adds on the VPU; the MXU
    # would be <2% utilized for K of a few channels.
    x = x_ref[...].astype(jnp.float32)              # (Bb, Cin, TN)
    w = w_ref[...].astype(jnp.float32)              # (Tco, Cin)
    acc = jnp.broadcast_to(b_ref[...].astype(jnp.float32)[None, :, :], o_ref.shape)
    for c in range(x.shape[1]):                     # tiny static unroll over Cin
        acc = acc + w[None, :, c:c + 1] * x[:, c:c + 1, :]
    o_ref[...] = acc.astype(o_ref.dtype)
    # TODO(synk): a stride-0 sublane-broadcast read (pl.ds(..., stride=0)) could
    # shave the per-channel broadcast; skipped since the kernel is HBM-bound.


# ----------------------------------------------------------------------------
# Tiling heuristics
# ----------------------------------------------------------------------------
def _vmem_budget_bytes():
    """Generation-aware VMEM budget (used for BOTH tiling and vmem_limit_bytes)."""
    try:
        cap = int(pltpu.get_tpu_info().vmem_capacity_bytes)
    except Exception:
        cap = 64 << 20                      # conservative (v7x-sized) fallback
    # Use ~half of physical VMEM: 32 MiB on v7x (64 MiB phys), 64 MiB on
    # v5e/v6e (128 MiB phys); leaves headroom for compiler scratch.
    return int(min(max(cap // 2, 16 << 20), 64 << 20))


def _pick_cout_tile(cout, cin, itemsize):
    """Tile Cout (MXU-aligned) once the resident weight block gets large."""
    if cout * cin * itemsize <= (2 << 20):
        return cout
    for t in (256, 128):
        if cout % t == 0:
            return t
    # TODO(synk): masked Cout tail for large non-aligned Cout; full block for now.
    return cout


def _pick_tn(hw, max_lanes):
    """Spatial lane tile: multiple of 128, <= max_lanes, prefers dividing HW."""
    if hw <= 128:
        return hw                           # full-extent block (always legal)
    cap = max(128, (min(hw, max_lanes) // 128) * 128)
    # Prefer the largest 128-multiple <= cap that divides HW exactly (no tail).
    t = cap
    while t >= 128:
        if hw % t == 0:
            break
        t -= 128
    if t >= 128 and t >= cap // 2:
        return t
    return cap                              # non-divisor: masked tail block


def _pick_bb(b, step_bytes_one, act_budget):
    """Images per grid step: amortize per-step cost when HW is small."""
    cap = min(b,
              max(1, act_budget // (2 * step_bytes_one)),
              max(1, _TARGET_STEP_BYTES // step_bytes_one),
              _MAX_BATCH_TILE)
    bb = 1
    for d in range(1, cap + 1):             # largest divisor of B <= cap
        if b % d == 0:
            bb = d
    return bb


# ----------------------------------------------------------------------------
# Forward
# ----------------------------------------------------------------------------
@jax.jit
def conv1_forward(x_nchw, weight, bias):
    """1x1 Conv2d forward.

    x_nchw: (B, Cin, H, W)   weight: (Cout, Cin, 1, 1)   bias: (Cout,)
    returns (B, Cout, H, W)
    """
    B, Cin, H, W = x_nchw.shape
    Cout = weight.shape[0]
    HW = H * W
    itemsize = jnp.dtype(x_nchw.dtype).itemsize

    # Free reshapes only (no transposes, no padding).
    x_flat = x_nchw.reshape(B, Cin, HW)              # (B, Cin, HW)
    w_mat = weight.reshape(Cout, Cin)                # (Cout, Cin)
    b_col = bias.reshape(Cout, 1)                    # (Cout, 1)

    budget = _vmem_budget_bytes()
    tco = _pick_cout_tile(Cout, Cin, itemsize)

    # Bytes left for (double-buffered) x/out blocks after the (double-buffered)
    # weight + bias blocks.
    act_budget = max(budget - 2 * (tco * Cin + tco) * itemsize, 1 << 20)

    per_lane = (Cin + tco) * itemsize                # x + out bytes per (image, lane)
    max_lanes = max(128, act_budget // (2 * per_lane))
    tn = _pick_tn(HW, min(max_lanes, _MAX_LANE_TILE))

    bb = _pick_bb(B, tn * per_lane, act_budget)

    n_hw = -(-HW // tn)
    n_co = Cout // tco
    n_b = B // bb

    # v7x has two TensorCores: keep >= 2 grid blocks so the parallel grid axes
    # can be sharded (harmless on single-TC v5e/v6e).
    if n_b * n_co * n_hw == 1:
        if bb > 1:
            new_bb = 1
            for d in range(1, bb):
                if B % d == 0:
                    new_bb = d
            bb = new_bb
            n_b = B // bb
        elif tn >= 256 and tn % 256 == 0:
            tn //= 2
            n_hw = -(-HW // tn)

    grid = (n_b, n_co, n_hw)

    kernel = _conv1x1_kernel_vpu if Cin <= 16 else _conv1x1_kernel_mxu
    # TODO(synk): on v5e the VPU cut-over could be raised to Cin<=32 (4x128^2 MXU).

    out_flat = pl.pallas_call(
        kernel,
        out_shape=jax.ShapeDtypeStruct((B, Cout, HW), x_nchw.dtype),
        grid_spec=pltpu.PrefetchScalarGridSpec(
            num_scalar_prefetch=0,
            grid=grid,
            in_specs=[
                # x block: (bb, Cin, tn) per (batch-block, spatial-tile)
                pl.BlockSpec((bb, Cin, tn), lambda b, co, s: (b, 0, s)),
                # weight block: (tco, Cin), revisited across batch/spatial
                pl.BlockSpec((tco, Cin), lambda b, co, s: (co, 0)),
                # bias column block
                pl.BlockSpec((tco, 1), lambda b, co, s: (co, 0)),
            ],
            out_specs=pl.BlockSpec((bb, tco, tn), lambda b, co, s: (b, co, s)),
        ),
        compiler_params=pltpu.CompilerParams(
            dimension_semantics=("parallel", "parallel", "parallel"),
            vmem_limit_bytes=int(budget),
        ),
    )(x_flat, w_mat, b_col)

    return out_flat.reshape(B, Cout, H, W)


if __name__ == "__main__":
    key = jax.random.PRNGKey(0)
    kx, kw, kb = jax.random.split(key, 3)

    # Small shapes consistent with the module: B=2, Cin=4, Cout=8, H=W=16
    B, Cin, Cout, H, W = 2, 4, 8, 16, 16

    x = jax.random.normal(kx, (B, Cin, H, W), dtype=jnp.float32)

    # Deterministic param init (matches nn.Conv2d's uniform(-1/sqrt(fan_in), .))
    fan_in = Cin * 1 * 1
    bound = 1.0 / float(jnp.sqrt(fan_in))
    weight = jax.random.uniform(kw, (Cout, Cin, 1, 1), jnp.float32, -bound, bound)
    bias = jax.random.uniform(kb, (Cout,), jnp.float32, -bound, bound)

    out = conv1_forward(x, weight, bias)
    out = jax.block_until_ready(out)

    # Reference check in plain JAX (einsum over channels + bias)
    ref = jnp.einsum("bchw,oc->bohw", x, weight.reshape(Cout, Cin)) \
        + bias.reshape(1, Cout, 1, 1)
    assert out.shape == (B, Cout, H, W)
    assert jnp.allclose(out, ref, atol=1e-5, rtol=1e-5)

    print("KERNEL_OK")
</pallas_src>

<mosaic_0001>
module attributes {stable_mosaic.version = 11 : i64} {
  func.func @_conv1x1_kernel_vpu(%arg0: i32, %arg1: i32, %arg2: i32, %arg3: memref<1x4x256xf32, #tpu.memory_space<vmem>>, %arg4: memref<8x4xf32, #tpu.memory_space<vmem>>, %arg5: memref<8x1xf32, #tpu.memory_space<vmem>>, %arg6: memref<1x8x256xf32, #tpu.memory_space<vmem>>) attributes {dimension_semantics = [#tpu.dimension_semantics<parallel>, #tpu.dimension_semantics<parallel>, #tpu.dimension_semantics<parallel>], iteration_bounds = array<i64: 2, 1, 1>, scalar_prefetch = 0 : i64, scratch_operands = 0 : i64, tpu.core_type = #tpu.core_type<tc>, window_params = [{transform_indices = @transform_0, window_bounds = array<i64: 1, 4, 256>}, {transform_indices = @transform_1, window_bounds = array<i64: 8, 4>}, {transform_indices = @transform_2, window_bounds = array<i64: 8, 1>}, {transform_indices = @transform_3, window_bounds = array<i64: 1, 8, 256>}]} {
    %c0 = arith.constant 0 : index
    %c0_0 = arith.constant 0 : index
    %c0_1 = arith.constant 0 : index
    %0 = vector.load %arg3[%c0, %c0_0, %c0_1] : memref<1x4x256xf32, #tpu.memory_space<vmem>>, vector<1x4x256xf32>
    %c0_2 = arith.constant 0 : index
    %c0_3 = arith.constant 0 : index
    %1 = vector.load %arg4[%c0_2, %c0_3] : memref<8x4xf32, #tpu.memory_space<vmem>>, vector<8x4xf32>
    %c0_4 = arith.constant 0 : index
    %c0_5 = arith.constant 0 : index
    %2 = vector.load %arg5[%c0_4, %c0_5] : memref<8x1xf32, #tpu.memory_space<vmem>>, vector<8x1xf32>
    %3 = vector.shape_cast %2 : vector<8x1xf32> to vector<1x8x1xf32>
    %4 = vector.shape_cast %3 : vector<1x8x1xf32> to vector<1x8x1xf32>
    %5 = vector.broadcast %4 : vector<1x8x1xf32> to vector<1x8x256xf32>
    %6 = vector.extract_strided_slice %1 {offsets = [0, 0], sizes = [8, 1], strides = [1, 1]} : vector<8x4xf32> to vector<8x1xf32>
    %7 = vector.shape_cast %6 : vector<8x1xf32> to vector<1x8x1xf32>
    %8 = vector.extract_strided_slice %0 {offsets = [0, 0, 0], sizes = [1, 1, 256], strides = [1, 1, 1]} : vector<1x4x256xf32> to vector<1x1x256xf32>
    %9 = vector.broadcast %7 : vector<1x8x1xf32> to vector<1x8x256xf32>
    %10 = vector.broadcast %8 : vector<1x1x256xf32> to vector<1x8x256xf32>
    %11 = arith.mulf %9, %10 : vector<1x8x256xf32>
    %12 = arith.addf %5, %11 : vector<1x8x256xf32>
    %13 = vector.extract_strided_slice %1 {offsets = [0, 1], sizes = [8, 1], strides = [1, 1]} : vector<8x4xf32> to vector<8x1xf32>
    %14 = vector.shape_cast %13 : vector<8x1xf32> to vector<1x8x1xf32>
    %15 = vector.extract_strided_slice %0 {offsets = [0, 1, 0], sizes = [1, 1, 256], strides = [1, 1, 1]} : vector<1x4x256xf32> to vector<1x1x256xf32>
    %16 = vector.broadcast %14 : vector<1x8x1xf32> to vector<1x8x256xf32>
    %17 = vector.broadcast %15 : vector<1x1x256xf32> to vector<1x8x256xf32>
    %18 = arith.mulf %16, %17 : vector<1x8x256xf32>
    %19 = arith.addf %12, %18 : vector<1x8x256xf32>
    %20 = vector.extract_strided_slice %1 {offsets = [0, 2], sizes = [8, 1], strides = [1, 1]} : vector<8x4xf32> to vector<8x1xf32>
    %21 = vector.shape_cast %20 : vector<8x1xf32> to vector<1x8x1xf32>
    %22 = vector.extract_strided_slice %0 {offsets = [0, 2, 0], sizes = [1, 1, 256], strides = [1, 1, 1]} : vector<1x4x256xf32> to vector<1x1x256xf32>
    %23 = vector.broadcast %21 : vector<1x8x1xf32> to vector<1x8x256xf32>
    %24 = vector.broadcast %22 : vector<1x1x256xf32> to vector<1x8x256xf32>
    %25 = arith.mulf %23, %24 : vector<1x8x256xf32>
    %26 = arith.addf %19, %25 : vector<1x8x256xf32>
    %27 = vector.extract_strided_slice %1 {offsets = [0, 3], sizes = [8, 1], strides = [1, 1]} : vector<8x4xf32> to vector<8x1xf32>
    %28 = vector.shape_cast %27 : vector<8x1xf32> to vector<1x8x1xf32>
    %29 = vector.extract_strided_slice %0 {offsets = [0, 3, 0], sizes = [1, 1, 256], strides = [1, 1, 1]} : vector<1x4x256xf32> to vector<1x1x256xf32>
    %30 = vector.broadcast %28 : vector<1x8x1xf32> to vector<1x8x256xf32>
    %31 = vector.broadcast %29 : vector<1x1x256xf32> to vector<1x8x256xf32>
    %32 = arith.mulf %30, %31 : vector<1x8x256xf32>
    %33 = arith.addf %26, %32 : vector<1x8x256xf32>
    %c0_6 = arith.constant 0 : index
    %c0_7 = arith.constant 0 : index
    %c0_8 = arith.constant 0 : index
    %34 = vector.load %arg6[%c0_6, %c0_7, %c0_8] : memref<1x8x256xf32, #tpu.memory_space<vmem>>, vector<1x8x256xf32>
    tpu.vector_store %arg6[%c0_6, %c0_7, %c0_8], %33 {strides = array<i32>} : memref<1x8x256xf32, #tpu.memory_space<vmem>>, vector<1x8x256xf32>,
    return
  }
  func.func @transform_0(%arg0: i32, %arg1: i32, %arg2: i32) -> (i32, i32, i32) {
    %c0_i32 = arith.constant 0 : i32
    %c0_i32_0 = arith.constant 0 : i32
    return %arg0, %c0_i32, %arg2 : i32, i32, i32
  }
  func.func @transform_1(%arg0: i32, %arg1: i32, %arg2: i32) -> (i32, i32) {
    %c0_i32 = arith.constant 0 : i32
    %c0_i32_0 = arith.constant 0 : i32
    return %arg1, %c0_i32 : i32, i32
  }
  func.func @transform_2(%arg0: i32, %arg1: i32, %arg2: i32) -> (i32, i32) {
    %c0_i32 = arith.constant 0 : i32
    %c0_i32_0 = arith.constant 0 : i32
    return %arg1, %c0_i32 : i32, i32
  }
  func.func @transform_3(%arg0: i32, %arg1: i32, %arg2: i32) -> (i32, i32, i32) {
    %c0_i32 = arith.constant 0 : i32
    return %arg0, %arg1, %arg2 : i32, i32, i32
  }
}

</mosaic_0001>

<llo_original>
// kernel: conv1_forward.1
$region0: #{conv1_forward.1}
  #allocation0 [shape = 'u32[]', space=smem, size = 0x4, offset = 0x4, fixed_abs, tag = 'smem constant byte address 0x4 - core index']
  #allocation1 [shape = 'u32[144,128]{1,0:T(1,128)}', space=vmem, size = 0x12000, scoped, tag = 'internal scratch']
  %s0 = inlined_call_operand.vmem [shape: f32[2,4,256], index: 0, kind: input, shape index: {}]
  %s1 = inlined_call_operand.vmem [shape: f32[8,4], index: 1, kind: input, shape index: {}]
  %s2 = inlined_call_operand.vmem [shape: f32[8,1], index: 2, kind: input, shape index: {}]
  %s3 = inlined_call_operand.vmem [shape: f32[2,8,256], index: 3, kind: output, shape index: {}]
  %s4 = sld [smem:[#allocation0]]
  $region45: #{conv1_forward.1} parent=0
    _
  %s6 = ssub.s32 1, %s4
  %s7 = scalar_select 0, %s6, %s4
  loop: start=0, step=1, limit=4
  $region2: #{conv1_forward.1} parent=0 // loop_pre_header
    _
  $region3: #{conv1_forward.1} parent=0 // loop_header
    %s9 = sphi 0, %s13
    %p10 = scmp.ge.s32.totalorder %s9, 4
    %s16 = sphi 0, %s35
    %s17 = sphi 0, %s31
    %s18 = sphi 0, %s27
    %s19 = sphi 0, %s16
    %s20 = sphi 0, %s17
    %s21 = sphi 0, %s18
    %s22 = sphi 0, %s19
    %s23 = sphi 0, %s20
    %s24 = sphi 0, %s21
    %s40 = sphi 0, %s42
    %s43 = sphi 0, %s40
    %s44 = sphi 0, %s43
    %s60 = sphi 0, %s44
    %s66 = sphi 0, %s68
    %s69 = sphi 0, %s66
    %s70 = sphi 0, %s69
    %s86 = sphi 0, %s70
    %s92 = sphi 0, %s94
    %s95 = sphi 0, %s92
    %s96 = sphi 0, %s95
    %s112 = sphi 0, %s96
    %s122 = sphi 0, %s124
    %s125 = sphi 0, %s122
    %s126 = sphi 0, %s125
    %s142 = sphi 0, %s126
  $region4: #{conv1_forward.1} parent=0 // loop_header_branch
    %12 = sbr.rel (%p10) target = $region8
  $region5: #{conv1_forward.1} parent=0 // loop_body
    %s14 = ssub.s32 %s9, 1
    %s15 = ssub.s32 %s9, 2
    %s25 = sadd.s32 1, %s18
    %p26 = scmp.ge.s32.totalorder %s25, 1
    %s27 = scalar_select %p26, 0, %s25
    %s28 = sadd.s32 1, %s17
    %s29 = scalar_select %p26, %s28, %s17
    %p30 = scmp.ge.s32.totalorder %s29, 1
    %s31 = scalar_select %p30, 0, %s29
    %s32 = sadd.s32 1, %s16
    %s33 = scalar_select %p30, %s32, %s16
    %p34 = scmp.ge.s32.totalorder %s33, 2
    %s35 = scalar_select %p34, 0, %s33
    %s36 = ssub.s32 %s16, %s35
    %s37 = ssub.s32 %s18, %s27
    %s38 = sor.u32 %s36, %s37
    %p39 = scmp.eq.s32.totalorder %s38, 0
    %s41 = sadd.s32 %s40, 1
    %s42 = scalar_select %p39, %s40, %s41
    %p45 = pneg %p39
    %p46 = scmp.eq.s32.totalorder %s9, 1
    %p47 = por %p45, %p46
    %p48 = scmp.ne.s32.totalorder %s40, %s43
    %p49 = scmp.eq.s32.totalorder %s9, 0
    %p50 = por %p48, %p49
    %p51 = scmp.ne.s32.totalorder %s40, %s43
    %p52 = scmp.eq.s32.totalorder %s14, 1
    %p53 = por %p51, %p52
    %p54 = scmp.ne.s32.totalorder %s43, %s44
    %p55 = scmp.eq.s32.totalorder %s14, 0
    %p56 = por %p54, %p55
    %p57 = scmp.ne.s32.totalorder %s43, %s44
    %p58 = scmp.eq.s32.totalorder %s15, 1
    %p59 = por %p57, %p58
    %p61 = scmp.ne.s32.totalorder %s44, %s60
    %p62 = scmp.eq.s32.totalorder %s15, 0
    %p63 = por %p61, %p62
    %s64 = ssub.s32 %s17, %s31
    %p65 = scmp.eq.s32.totalorder %s64, 0
    %s67 = sadd.s32 %s66, 1
    %s68 = scalar_select %p65, %s66, %s67
    %p71 = pneg %p65
    %p72 = scmp.eq.s32.totalorder %s9, 1
    %p73 = por %p71, %p72
    %p74 = scmp.ne.s32.totalorder %s66, %s69
    %p75 = scmp.eq.s32.totalorder %s9, 0
    %p76 = por %p74, %p75
    %p77 = scmp.ne.s32.totalorder %s66, %s69
    %p78 = scmp.eq.s32.totalorder %s14, 1
    %p79 = por %p77, %p78
    %p80 = scmp.ne.s32.totalorder %s69, %s70
    %p81 = scmp.eq.s32.totalorder %s14, 0
    %p82 = por %p80, %p81
    %p83 = scmp.ne.s32.totalorder %s69, %s70
    %p84 = scmp.eq.s32.totalorder %s15, 1
    %p85 = por %p83, %p84
    %p87 = scmp.ne.s32.totalorder %s70, %s86
    %p88 = scmp.eq.s32.totalorder %s15, 0
    %p89 = por %p87, %p88
    %s90 = ssub.s32 %s17, %s31
    %p91 = scmp.eq.s32.totalorder %s90, 0
    %s93 = sadd.s32 %s92, 1
    %s94 = scalar_select %p91, %s92, %s93
    %p97 = pneg %p91
    %p98 = scmp.eq.s32.totalorder %s9, 1
    %p99 = por %p97, %p98
    %p100 = scmp.ne.s32.totalorder %s92, %s95
    %p101 = scmp.eq.s32.totalorder %s9, 0
    %p102 = por %p100, %p101
    %p103 = scmp.ne.s32.totalorder %s92, %s95
    %p104 = scmp.eq.s32.totalorder %s14, 1
    %p105 = por %p103, %p104
    %p106 = scmp.ne.s32.totalorder %s95, %s96
    %p107 = scmp.eq.s32.totalorder %s14, 0
    %p108 = por %p106, %p107
    %p109 = scmp.ne.s32.totalorder %s95, %s96
    %p110 = scmp.eq.s32.totalorder %s15, 1
    %p111 = por %p109, %p110
    %p113 = scmp.ne.s32.totalorder %s96, %s112
    %p114 = scmp.eq.s32.totalorder %s15, 0
    %p115 = por %p113, %p114
    %s116 = ssub.s32 %s16, %s35
    %s117 = ssub.s32 %s17, %s31
    %s118 = sor.u32 %s116, %s117
    %s119 = ssub.s32 %s18, %s27
    %s120 = sor.u32 %s118, %s119
    %p121 = scmp.eq.s32.totalorder %s120, 0
    %s123 = sadd.s32 %s122, 1
    %s124 = scalar_select %p121, %s122, %s123
    %p127 = pneg %p121
    %p128 = scmp.eq.s32.totalorder %s9, 1
    %p129 = por %p127, %p128
    %p130 = scmp.ne.s32.totalorder %s122, %s125
    %p131 = scmp.eq.s32.totalorder %s9, 0
    %p132 = por %p130, %p131
    %p133 = scmp.ne.s32.totalorder %s122, %s125
    %p134 = scmp.eq.s32.totalorder %s14, 1
    %p135 = por %p133, %p134
    %p136 = scmp.ne.s32.totalorder %s125, %s126
    %p137 = scmp.eq.s32.totalorder %s14, 0
    %p138 = por %p136, %p137
    %p139 = scmp.ne.s32.totalorder %s125, %s126
    %p140 = scmp.eq.s32.totalorder %s15, 1
    %p141 = por %p139, %p140
    %p143 = scmp.ne.s32.totalorder %s126, %s142
    %p144 = scmp.eq.s32.totalorder %s15, 0
    %p145 = por %p143, %p144
    %p146 = scmp.le.s32.totalorder 1, %s9
    %p147 = scmp.lt.s32.totalorder %s9, 3
    %p148 = pnand %p146, %p147
    %p149 = pneg %p148
    // Predicated region
    $region9: #{conv1_forward.1} parent=5 // pred_check
      _
    $region10: #{conv1_forward.1} parent=5 // pred_check_branch
      %151 = sbr.rel (%p148) target = $region12
    $region11: #{conv1_forward.1} parent=5 // pred_region
      %s152 = ssub.s32 %s9, 1
      // Predicated region
      $region13: #{conv1_forward.1} parent=11 // pred_check
        %p153 = pneg %p82
      $region14: #{conv1_forward.1} parent=11 // pred_check_branch
        %155 = sbr.rel (%p153) target = $region16
      $region15: #{conv1_forward.1} parent=11 // pred_region
        %p156 = scmp.lt.s32.totalorder %s20, 0
        %s157 = scalar_select %p156, %s20, 0
        %s158 = smul.addr %s157, 8
        %s159 = scalar_lea.vmem %s1, %s158
      $region16: #{conv1_forward.1} parent=11 // pred_fallthru
        _
      // Predicated region
      $region17: #{conv1_forward.1} parent=11 // pred_check
        %p160 = pneg %p108
      $region18: #{conv1_forward.1} parent=11 // pred_check_branch
        %162 = sbr.rel (%p160) target = $region20
      $region19: #{conv1_forward.1} parent=11 // pred_region
        %p163 = scmp.lt.s32.totalorder %s20, 0
        %s164 = scalar_select %p163, %s20, 0
        %s165 = smul.addr %s164, 8
        %s166 = scalar_lea.vmem %s2, %s165
      $region20: #{conv1_forward.1} parent=11 // pred_fallthru
        _
    $region12: #{conv1_forward.1} parent=5 // pred_fallthru
      _
    %p167 = scmp.lt.s32.totalorder %s9, 2
    // Predicated region
    $region21: #{conv1_forward.1} parent=5 // pred_check
      %p168 = pneg %p167
    $region22: #{conv1_forward.1} parent=5 // pred_check_branch
      %170 = sbr.rel (%p168) target = $region24
    $region23: #{conv1_forward.1} parent=5 // pred_region
      // Predicated region
      $region25: #{conv1_forward.1} parent=23 // pred_check
        %p171 = pneg %p50
      $region26: #{conv1_forward.1} parent=23 // pred_check_branch
        %173 = sbr.rel (%p171) target = $region28
      $region27: #{conv1_forward.1} parent=23 // pred_region
        %s174 = smul.u32 2, %s18
        %p175 = scmp.lt.s32.totalorder %s16, 1
        %s176 = scalar_select %p175, %s16, 1
        %p177 = scmp.lt.s32.totalorder %s174, 1
        %s178 = scalar_select %p177, %s174, 1
        %s179 = smul.addr %s176, 2
        %s180 = sadd.s32 %s178, %s179
        %s181 = smul.addr %s180, 4
        %s182 = scalar_lea.vmem %s0, %s181
        %s183 = smul.u32 2, %s18
      $region28: #{conv1_forward.1} parent=23 // pred_fallthru
        _
    $region24: #{conv1_forward.1} parent=5 // pred_fallthru
      _
    %p184 = scmp.le.s32.totalorder 1, %s9
    %p185 = scmp.lt.s32.totalorder %s9, 3
    %p186 = pnand %p184, %p185
    %p187 = pneg %p186
    // Predicated region
    $region29: #{conv1_forward.1} parent=5 // pred_check
      _
    $region30: #{conv1_forward.1} parent=5 // pred_check_branch
      %189 = sbr.rel (%p186) target = $region32
    $region31: #{conv1_forward.1} parent=5 // pred_region
      %s190 = ssub.s32 %s9, 1
      %s191 = smul.u32 2, %s21
      %p192 = scmp.lt.s32.totalorder %s19, 1
      %s193 = scalar_select %p192, %s19, 1
      %p194 = scmp.lt.s32.totalorder %s191, 1
      %s195 = scalar_select %p194, %s191, 1
      %s196 = smul.addr %s193, 2
      %s197 = sadd.s32 %s195, %s196
      %s198 = smul.addr %s197, 4
      %s199 = scalar_lea.vmem %s0, %s198
      %p200 = pneg %p56
      %p201 = pneg %p53
      %p202 = scmp.lt.s32.totalorder %s20, 0
      %s203 = scalar_select %p202, %s20, 0
      %s204 = smul.addr %s203, 8
      %s205 = scalar_lea.vmem %s1, %s204
      %p206 = pneg %p82
      %p207 = pneg %p79
      %p208 = scmp.lt.s32.totalorder %s20, 0
      %s209 = scalar_select %p208, %s20, 0
      %s210 = smul.addr %s209, 8
      %s211 = scalar_lea.vmem %s2, %s210
      %p212 = pneg %p108
      %p213 = pneg %p105
      %p214 = pneg %p138
      %p215 = pneg %p135
      %s216 = smul.u32 2, %s21
      %p217 = scmp.lt.s32.totalorder %s19, 1
      %s218 = scalar_select %p217, %s19, 1
      %p219 = scmp.lt.s32.totalorder %s20, 0
      %s220 = scalar_select %p219, %s20, 0
      %p221 = scmp.lt.s32.totalorder %s216, 1
      %s222 = scalar_select %p221, %s216, 1
      %s223 = smul.addr %s220, 2
      %s224 = sadd.s32 %s222, %s223
      %s225 = smul.addr %s218, 2
      %s226 = sadd.s32 %s224, %s225
      %s227 = smul.addr %s226, 8
      %s228 = scalar_lea.vmem %s3, %s227
      %s229 = smul.u32 2, %s21
      %p230 = scmp.lt.s32.totalorder %s19, 1
      %s231 = scalar_select %p230, %s19, 1
      %p232 = scmp.lt.s32.totalorder %s229, 1
      %s233 = scalar_select %p232, %s229, 1
      %s234 = smul.addr %s231, 2
      %s235 = sadd.s32 %s233, %s234
      %s236 = smul.addr %s235, 4
      %s237 = scalar_lea.vmem %s0, %s236
      %s238 = smul.u32 2, %s21
      %p239 = scmp.lt.s32.totalorder %s20, 0
      %s240 = scalar_select %p239, %s20, 0
      %s241 = smul.addr %s240, 8
      %s242 = scalar_lea.vmem %s1, %s241
      %p243 = scmp.lt.s32.totalorder %s20, 0
      %s244 = scalar_select %p243, %s20, 0
      %s245 = smul.addr %s244, 8
      %s246 = scalar_lea.vmem %s2, %s245
      %s247 = smul.u32 2, %s21
      %p248 = scmp.lt.s32.totalorder %s19, 1
      %s249 = scalar_select %p248, %s19, 1
      %p250 = scmp.lt.s32.totalorder %s20, 0
      %s251 = scalar_select %p250, %s20, 0
      %p252 = scmp.lt.s32.totalorder %s247, 1
      %s253 = scalar_select %p252, %s247, 1
      %s254 = smul.addr %s251, 2
      %s255 = sadd.s32 %s253, %s254
      %s256 = smul.addr %s249, 2
      %s257 = sadd.s32 %s255, %s256
      %s258 = smul.addr %s257, 8
      %s259 = scalar_lea.vmem %s3, %s258
      %s260 = smul.u32 2, %s21
      %v261 = vld [vmem:[%s237] sm:$0xff]
      %v262 = vld [vmem:[%s242] sm:$0xff]
      %v263 = vld [vmem:[%s246] sm:$0xff]
      %265 = vset.pattern.permute.xlu0 0
      %266 = vperm.xlu0 %265, %v263
      %v267 = vpop.permute.xlu0 %266
      %270 = vset.pattern.permute.xlu0 0
      %271 = vperm.xlu0 %270, %v262
      %v272 = vpop.permute.xlu0 %271
      %v275 = vlaneseq
      %v276 = vshrl.u32 %v275, 7
      %v277 = vsub.s32 0, %v276
      %v278 = vrot.slane %v261, %v277
      %v279 = vlaneseq
      %v280 = vshrl.u32 %v279, 7
      %v281 = vsub.s32 4, %v280
      %v282 = vrot.slane %v261, %v281
      %v285 = vlaneseq
      %v286 = vshrl.u32 %v285, 7
      %v287 = vsub.s32 0, %v286
      %v288 = vrot.slane %v278, %v287
      %v289 = vlaneseq
      %v290 = vshrl.u32 %v289, 7
      %v291 = vsub.s32 0, %v290
      %v292 = vrot.slane %v282, %v291
      %v293 = vmul.f32 %v272, %v288
      %v294 = vmul.f32 %v272, %v292
      %v295 = vadd.f32 %v267, %v293
      %v296 = vadd.f32 %v267, %v294
      %297 = vset.pattern.permute.xlu0 1
      %298 = vperm.xlu0 %297, %v262
      %v299 = vpop.permute.xlu0 %298
      %v301 = vlaneseq
      %v302 = vshrl.u32 %v301, 7
      %v303 = vsub.s32 1, %v302
      %v304 = vrot.slane %v261, %v303
      %v305 = vlaneseq
      %v306 = vshrl.u32 %v305, 7
      %v307 = vsub.s32 5, %v306
      %v308 = vrot.slane %v261, %v307
      %v311 = vlaneseq
      %v312 = vshrl.u32 %v311, 7
      %v313 = vsub.s32 1, %v312
      %v314 = vrot.slane %v304, %v313
      %v315 = vlaneseq
      %v316 = vshrl.u32 %v315, 7
      %v317 = vsub.s32 1, %v316
      %v318 = vrot.slane %v308, %v317
      %v319 = vmul.f32 %v299, %v314
      %v320 = vmul.f32 %v299, %v318
      %v321 = vadd.f32 %v295, %v319
      %v322 = vadd.f32 %v296, %v320
      %323 = vset.pattern.permute.xlu0 2
      %324 = vperm.xlu0 %323, %v262
      %v325 = vpop.permute.xlu0 %324
      %v327 = vlaneseq
      %v328 = vshrl.u32 %v327, 7
      %v329 = vsub.s32 2, %v328
      %v330 = vrot.slane %v261, %v329
      %v331 = vlaneseq
      %v332 = vshrl.u32 %v331, 7
      %v333 = vsub.s32 6, %v332
      %v334 = vrot.slane %v261, %v333
      %v337 = vlaneseq
      %v338 = vshrl.u32 %v337, 7
      %v339 = vsub.s32 2, %v338
      %v340 = vrot.slane %v330, %v339
      %v341 = vlaneseq
      %v342 = vshrl.u32 %v341, 7
      %v343 = vsub.s32 2, %v342
      %v344 = vrot.slane %v334, %v343
      %v345 = vmul.f32 %v325, %v340
      %v346 = vmul.f32 %v325, %v344
      %v347 = vadd.f32 %v321, %v345
      %v348 = vadd.f32 %v322, %v346
      %349 = vset.pattern.permute.xlu0 3
      %350 = vperm.xlu0 %349, %v262
      %v351 = vpop.permute.xlu0 %350
      %v353 = vlaneseq
      %v354 = vshrl.u32 %v353, 7
      %v355 = vsub.s32 3, %v354
      %v356 = vrot.slane %v261, %v355
      %v357 = vlaneseq
      %v358 = vshrl.u32 %v357, 7
      %v359 = vsub.s32 7, %v358
      %v360 = vrot.slane %v261, %v359
      %v363 = vlaneseq
      %v364 = vshrl.u32 %v363, 7
      %v365 = vsub.s32 3, %v364
      %v366 = vrot.slane %v356, %v365
      %v367 = vlaneseq
      %v368 = vshrl.u32 %v367, 7
      %v369 = vsub.s32 3, %v368
      %v370 = vrot.slane %v360, %v369
      %v371 = vmul.f32 %v351, %v366
      %v372 = vmul.f32 %v351, %v370
      %v373 = vadd.f32 %v347, %v371
      %v374 = vadd.f32 %v348, %v372
      %375 = vst [vmem:[%s259] sm:$0xff] %v373
      %376 = vst [vmem:[%s259 + $0x8] sm:$0xff] %v374
      %s377 = smul.u32 2, %s21
      %p378 = scmp.lt.s32.totalorder %s19, 1
      %s379 = scalar_select %p378, %s19, 1
      %p380 = scmp.lt.s32.totalorder %s20, 0
      %s381 = scalar_select %p380, %s20, 0
      %p382 = scmp.lt.s32.totalorder %s377, 1
      %s383 = scalar_select %p382, %s377, 1
      %s384 = smul.addr %s381, 2
      %s385 = sadd.s32 %s383, %s384
      %s386 = smul.addr %s379, 2
      %s387 = sadd.s32 %s385, %s386
      %s388 = smul.addr %s387, 8
      %s389 = scalar_lea.vmem %s3, %s388
      // Predicated region
      $region33: #{conv1_forward.1} parent=31 // pred_check
        %p390 = pneg %p135
      $region34: #{conv1_forward.1} parent=31 // pred_check_branch
        %392 = sbr.rel (%p390) target = $region36
      $region35: #{conv1_forward.1} parent=31 // pred_region
        %s393 = smul.u32 2, %s21
      $region36: #{conv1_forward.1} parent=31 // pred_fallthru
        _
    $region32: #{conv1_forward.1} parent=5 // pred_fallthru
      _
    %p394 = scmp.le.s32.totalorder 2, %s9
    // Predicated region
    $region37: #{conv1_forward.1} parent=5 // pred_check
      %p395 = pneg %p394
    $region38: #{conv1_forward.1} parent=5 // pred_check_branch
      %397 = sbr.rel (%p395) target = $region40
    $region39: #{conv1_forward.1} parent=5 // pred_region
      %s398 = ssub.s32 %s9, 2
      // Predicated region
      $region41: #{conv1_forward.1} parent=39 // pred_check
        %p399 = pneg %p141
      $region42: #{conv1_forward.1} parent=39 // pred_check_branch
        %401 = sbr.rel (%p399) target = $region44
      $region43: #{conv1_forward.1} parent=39 // pred_region
        %s402 = smul.u32 2, %s24
        %p403 = scmp.lt.s32.totalorder %s22, 1
        %s404 = scalar_select %p403, %s22, 1
        %p405 = scmp.lt.s32.totalorder %s23, 0
        %s406 = scalar_select %p405, %s23, 0
        %p407 = scmp.lt.s32.totalorder %s402, 1
        %s408 = scalar_select %p407, %s402, 1
        %s409 = smul.addr %s406, 2
        %s410 = sadd.s32 %s408, %s409
        %s411 = smul.addr %s404, 2
        %s412 = sadd.s32 %s410, %s411
        %s413 = smul.addr %s412, 8
        %s414 = scalar_lea.vmem %s3, %s413
      $region44: #{conv1_forward.1} parent=39 // pred_fallthru
        _
    $region40: #{conv1_forward.1} parent=5 // pred_fallthru
      _
  $region6: #{conv1_forward.1} parent=0 // loop_footer
    %s13 = sadd.s32 1, %s9
  $region7: #{conv1_forward.1} parent=0 // loop_footer_branch
    %8 = sbr.rel target = $region3
  $region8: #{conv1_forward.1} parent=0 // loop_exit
    _

</llo_original>
